<compile_context>
chip_gen: v7x
topology: tpu7x:2x2x1
jax: 0.10.0
libtpu: 0.0.40
codegen_flags: <defaults>
</compile_context>

<pallas_src>
import jax
import jax.numpy as jnp
from jax.experimental import pallas as pl
from jax.experimental.pallas import tpu as pltpu


def _copy_kernel(x_ref, o_ref):
    # Entire NoneLayer forward: o = x.
    o_ref[...] = x_ref[...]


# ~4 MiB per block keeps (in + out) * double-buffer well under v7x's 64 MiB VMEM.
_TARGET_BLOCK_BYTES = 4 * 1024 * 1024
_SMALL_BYTES = 1 << 20  # below this, a kernel launch is pure overhead


def none_layer(x: jax.Array) -> jax.Array:
    """Identity forward pass of NoneLayer.  Free: no kernel, no copy."""
    return x


def none_layer_copy(x: jax.Array) -> jax.Array:
    """Materialized identity (HBM->HBM copy) as a tiled, lane-dense Pallas kernel."""
    n = x.size
    itemsize = jnp.dtype(x.dtype).itemsize

    # Pick the widest lane-dense width (multiple of 128) that divides the flat size.
    lane_width = None
    for w in (1024, 512, 256, 128):
        if n % w == 0:
            lane_width = w
            break

    if lane_width is None:
        # Flat size not a multiple of 128: fall back to a single full-extent
        # block (always legal).  Only hit for tiny/odd shapes where tiling
        # would not help anyway.
        out = pl.pallas_call(
            _copy_kernel,
            out_shape=jax.ShapeDtypeStruct(x.shape, x.dtype),
            grid=(1,),
            in_specs=[pl.BlockSpec(x.shape, lambda i: (0,) * x.ndim)],
            out_specs=pl.BlockSpec(x.shape, lambda i: (0,) * x.ndim),
            compiler_params=pltpu.CompilerParams(
                dimension_semantics=("arbitrary",),
            ),
        )(x)
        return out

    rows = n // lane_width
    x2d = x.reshape(rows, lane_width)

    # Block rows sized for ~4 MiB per block; power-of-two -> multiple of 8.
    block_rows = max(8, _TARGET_BLOCK_BYTES // (lane_width * itemsize))
    if block_rows >= rows:
        block_rows = rows  # full extent along sublane axis is always legal

    grid = (pl.cdiv(rows, block_rows),)

    out2d = pl.pallas_call(
        _copy_kernel,
        out_shape=jax.ShapeDtypeStruct((rows, lane_width), x.dtype),
        grid=grid,
        in_specs=[pl.BlockSpec((block_rows, lane_width), lambda i: (i, 0))],
        out_specs=pl.BlockSpec((block_rows, lane_width), lambda i: (i, 0)),
        compiler_params=pltpu.CompilerParams(
            # Parallel grid axis -> shards across the 2 TensorCores on v7x.
            dimension_semantics=("parallel",),
            vmem_limit_bytes=32 * 1024 * 1024,
        ),
    )(x2d)

    return out2d.reshape(x.shape)


def none_layer_dispatch(x: jax.Array, materialize: bool = False) -> jax.Array:
    """Size-aware dispatch: identity passthrough unless a copy is forced for
    a large activation (small tensors never justify a kernel launch)."""
    if not materialize or x.size * jnp.dtype(x.dtype).itemsize < _SMALL_BYTES:
        return none_layer(x)
    return none_layer_copy(x)


if __name__ == "__main__":
    key = jax.random.PRNGKey(0)
    # NCHW input, small shape: batch=2, channels=4, spatial=16x16 (32 KiB).
    x = jax.random.normal(key, (2, 4, 16, 16), dtype=jnp.float32)

    # Fast path: true module semantics, zero cost.
    y_fast = none_layer(x)
    assert y_fast is x

    # Pallas kernel path (exercised explicitly so the kernel runs once).
    y = none_layer_copy(x)
    jax.block_until_ready(y)

    assert y.shape == x.shape and y.dtype == x.dtype
    assert jnp.array_equal(y, x), "identity kernel did not reproduce input"
    print("KERNEL_OK")
</pallas_src>

<mosaic_0001>
module attributes {stable_mosaic.version = 11 : i64} {
  func.func @_copy_kernel(%arg0: i32, %arg1: memref<2x1024xf32, #tpu.memory_space<vmem>>, %arg2: memref<2x1024xf32, #tpu.memory_space<vmem>>) attributes {dimension_semantics = [#tpu.dimension_semantics<parallel>], iteration_bounds = array<i64: 1>, scalar_prefetch = 0 : i64, scratch_operands = 0 : i64, tpu.core_type = #tpu.core_type<tc>, window_params = [{transform_indices = @transform_0, window_bounds = array<i64: 2, 1024>}, {transform_indices = @transform_1, window_bounds = array<i64: 2, 1024>}]} {
    %c0 = arith.constant 0 : index
    %c0_0 = arith.constant 0 : index
    %0 = vector.load %arg1[%c0, %c0_0] : memref<2x1024xf32, #tpu.memory_space<vmem>>, vector<2x1024xf32>
    %c0_1 = arith.constant 0 : index
    %c0_2 = arith.constant 0 : index
    %1 = vector.load %arg2[%c0_1, %c0_2] : memref<2x1024xf32, #tpu.memory_space<vmem>>, vector<2x1024xf32>
    tpu.vector_store %arg2[%c0_1, %c0_2], %0 {strides = array<i32>} : memref<2x1024xf32, #tpu.memory_space<vmem>>, vector<2x1024xf32>,
    return
  }
  func.func @transform_0(%arg0: i32) -> (i32, i32) {
    %c0_i32 = arith.constant 0 : i32
    %c0_i32_0 = arith.constant 0 : i32
    return %arg0, %c0_i32 : i32, i32
  }
  func.func @transform_1(%arg0: i32) -> (i32, i32) {
    %c0_i32 = arith.constant 0 : i32
    %c0_i32_0 = arith.constant 0 : i32
    return %arg0, %c0_i32 : i32, i32
  }
}

</mosaic_0001>

<llo_original>
// kernel: tpu_custom_call.1
$region0: #{tpu_custom_call.1}
  #allocation0 [shape = 'u32[]', space=smem, size = 0x4, offset = 0x4, fixed_abs, tag = 'smem constant byte address 0x4 - core index']
  #allocation1 [shape = 'u32[144,128]{1,0:T(1,128)}', space=vmem, size = 0x12000, scoped, tag = 'internal scratch']
  %s0 = inlined_call_operand.hbm [shape: f32[2,1024], index: 0, kind: input, shape index: {}]
  %s1 = inlined_call_operand.hbm [shape: f32[2,1024], index: 1, kind: output, shape index: {}]
  %s2 = sld [smem:[#allocation0]]
  $region18: #{tpu_custom_call.1} parent=0
    _
  %s4 = ssub.s32 1, %s2
  %s5 = scalar_select 0, %s4, %s2
  $region1: #{tpu_custom_call.1} parent=0
    #allocation2 [shape = 'u8[8192]{0}', space=vmem, size = 0x2000, scoped, tag = 'input window, operand 0, single buffered']
    #allocation3 [shape = 's32[1]{0}', space=sflag, size = 0x4, scoped, tag = 'scoped memory for tpu_custom_call.1']
    #allocation4 [shape = 's32[1]{0}', space=sflag, size = 0x4, scoped, tag = 'scoped memory for tpu_custom_call.1']
    #allocation5 [shape = 'u8[8192]{0}', space=vmem, size = 0x2000, scoped, tag = 'output window, operand 0, single buffered']
    %6 = vsyncpa [#allocation3], 0
    %7 = vsyncpa [#allocation4], 0
    // Predicated region
    $region2: #{tpu_custom_call.1} parent=1 // pred_check
      _
    $region3: #{tpu_custom_call.1} parent=1 // pred_check_branch
      %9 = sbr.rel (0) target = $region5
    $region4: #{tpu_custom_call.1} parent=1 // pred_region
      %s11 = ssub.s32 256, 256
      %12 = vsyncadd [#allocation3], %s11
      %s14 = sshll.u32 [#allocation2], 4
      %s15 = int_to_ptr.vmem [resolvable:$true] %s14
      %17 = dma.hbm_to_vmem [thread:$0]  %s0, 256, %s15, [#allocation3]
    $region5: #{tpu_custom_call.1} parent=1 // pred_fallthru
      _
    // Predicated region
    $region6: #{tpu_custom_call.1} parent=1 // pred_check
      _
    $region7: #{tpu_custom_call.1} parent=1 // pred_check_branch
      %19 = sbr.rel (0) target = $region9
    $region8: #{tpu_custom_call.1} parent=1 // pred_region
      %20 = dma.done [#allocation3], 256
    $region9: #{tpu_custom_call.1} parent=1 // pred_fallthru
      _
    %v21 = vld [vmem:[#allocation2] sm:$0xff]
    %v22 = vld [vmem:[#allocation2 + $0x8] sm:$0xff]
    %23 = vst [vmem:[#allocation5] sm:$0xff] %v21
    %24 = vst [vmem:[#allocation5 + $0x8] sm:$0xff] %v22
    // Predicated region
    $region10: #{tpu_custom_call.1} parent=1 // pred_check
      _
    $region11: #{tpu_custom_call.1} parent=1 // pred_check_branch
      %26 = sbr.rel (0) target = $region13
    $region12: #{tpu_custom_call.1} parent=1 // pred_region
      %s28 = ssub.s32 256, 256
      %29 = vsyncadd [#allocation4], %s28
      %s31 = sshll.u32 [#allocation5], 4
      %s32 = int_to_ptr.vmem [resolvable:$true] %s31
      %34 = dma.vmem_to_hbm [thread:$0]  %s32, 256, %s1, [#allocation4]
    $region13: #{tpu_custom_call.1} parent=1 // pred_fallthru
      _
    // Predicated region
    $region14: #{tpu_custom_call.1} parent=1 // pred_check
      _
    $region15: #{tpu_custom_call.1} parent=1 // pred_check_branch
      %36 = sbr.rel (0) target = $region17
    $region16: #{tpu_custom_call.1} parent=1 // pred_region
      %37 = dma.done [#allocation4], 256
    $region17: #{tpu_custom_call.1} parent=1 // pred_fallthru
      _
    %38 = vsyncpa [#allocation3], 1
    %39 = vsyncpa [#allocation4], 1

</llo_original>
